<compile_context>
chip_gen: v7x
topology: tpu7x:2x2x1
jax: 0.10.0
libtpu: 0.0.40
codegen_flags: <defaults>
</compile_context>

<pallas_src>
import functools

import jax
import jax.numpy as jnp
from jax import lax
from jax.experimental import pallas as pl
from jax.experimental.pallas import tpu as pltpu


def _round_up(n, m):
    return (n + m - 1) // m * m


def _self_attention_1d_kernel(x_ref, wqkv_ref, bqkv_ref, gamma_ref,
                              out_ref, attn_ref, *, cq, cq_pad, c):
    # x_ref: (1, W, C) channels-last slice of one batch element.
    x = x_ref[0]                                                        # (W, C)

    # One fused MXU push for the query/key/value Conv1d(k=1) projections:
    # (W, C) contracted with (P, C) along C -> (W, P).   (rhs-transposed: native MXU form)
    qkv = lax.dot_general(x, wqkv_ref[...], (((1,), (1,)), ((), ())),
                          preferred_element_type=jnp.float32)
    qkv = qkv + bqkv_ref[...]                                           # broadcast (1, P) bias

    q = qkv[:, 0:cq]                                                    # (W, Cq)
    k = qkv[:, cq_pad:cq_pad + cq]                                      # (W, Cq)
    v = qkv[:, 2 * cq_pad:2 * cq_pad + c]                               # (W, C)

    # energy[i, j] = sum_c q[i, c] * k[j, c]   (rhs-transposed dot_general, no .T)
    energy = lax.dot_general(q, k, (((1,), (1,)), ((), ())),
                             preferred_element_type=jnp.float32)        # (W, W)

    # Softmax over keys (last dim); exp on the EUP, reciprocal approx -> EUP slot, ~free.
    e_max = jnp.max(energy, axis=-1, keepdims=True)
    p = jnp.exp(energy - e_max)
    denom = jnp.sum(p, axis=-1, keepdims=True)
    attention = p * pl.reciprocal(denom, approx=True)                   # (W, W)

    # out^T = attention @ v^T   (standard MKN matmul, no .T)
    out_t = jnp.dot(attention, v, preferred_element_type=jnp.float32)   # (W, C)

    gamma = gamma_ref[0]                                                # SMEM scalar
    out_ref[0] = gamma * out_t + x                                      # channels-last result
    attn_ref[0] = attention


def self_attention_1d(x, wq, bq, wk, bk, wv, bv, gamma):
    """x: (B, C, W) NCW as in PyTorch Conv1d. Returns (out (B, C, W), attention (B, W, W))."""
    B, C, W = x.shape
    Cq = wq.shape[0]
    Cq_pad = _round_up(Cq, 8)            # 8-aligned packing offsets for q/k/v slices
    P = 2 * Cq_pad + C

    # Fused, aligned projection weight / bias: rows [0:Cq]=Wq, [Cq_pad:]=Wk, [2*Cq_pad:]=Wv.
    wqkv = jnp.zeros((P, C), jnp.float32)
    wqkv = wqkv.at[0:Cq].set(wq)
    wqkv = wqkv.at[Cq_pad:Cq_pad + Cq].set(wk)
    wqkv = wqkv.at[2 * Cq_pad:2 * Cq_pad + C].set(wv)
    bqkv = jnp.zeros((1, P), jnp.float32)
    bqkv = bqkv.at[0, 0:Cq].set(bq)
    bqkv = bqkv.at[0, Cq_pad:Cq_pad + Cq].set(bk)
    bqkv = bqkv.at[0, 2 * Cq_pad:2 * Cq_pad + C].set(bv)
    gamma = jnp.asarray(gamma, jnp.float32).reshape((1,))

    x_t = jnp.swapaxes(x, 1, 2)          # (B, W, C) channels-last for the kernel

    kernel = functools.partial(_self_attention_1d_kernel, cq=Cq, cq_pad=Cq_pad, c=C)

    out_t, attention = pl.pallas_call(
        kernel,
        out_shape=(
            jax.ShapeDtypeStruct((B, W, C), jnp.float32),
            jax.ShapeDtypeStruct((B, W, W), jnp.float32),
        ),
        grid_spec=pltpu.PrefetchScalarGridSpec(
            num_scalar_prefetch=0,
            grid=(B,),
            in_specs=[
                pl.BlockSpec((1, W, C), lambda b: (b, 0, 0)),           # x (channels-last)
                pl.BlockSpec((P, C), lambda b: (0, 0)),                 # fused Wqkv (resident)
                pl.BlockSpec((1, P), lambda b: (0, 0)),                 # fused bias (resident)
                pl.BlockSpec(memory_space=pltpu.MemorySpace.SMEM),      # gamma scalar
            ],
            out_specs=[
                pl.BlockSpec((1, W, C), lambda b: (b, 0, 0)),           # out (channels-last)
                pl.BlockSpec((1, W, W), lambda b: (b, 0, 0)),           # attention
            ],
        ),
        compiler_params=pltpu.CompilerParams(
            dimension_semantics=(pltpu.PARALLEL,)),
    )(x_t, wqkv, bqkv, gamma)

    out = jnp.swapaxes(out_t, 1, 2)      # back to (B, C, W)
    return out, attention


def reference(x, wq, bq, wk, bk, wv, bv, gamma):
    # Pure-JAX reference mirroring the PyTorch forward.
    q = jnp.einsum('oc,bcw->bow', wq, x) + bq[None, :, None]
    k = jnp.einsum('oc,bcw->bow', wk, x) + bk[None, :, None]
    v = jnp.einsum('oc,bcw->bow', wv, x) + bv[None, :, None]
    energy = jnp.einsum('bcq,bck->bqk', q, k)            # query.permute(0,2,1) @ key
    attention = jax.nn.softmax(energy, axis=-1)
    out = jnp.einsum('bcw,bqw->bcq', v, attention)       # value @ attention^T
    return gamma[0] * out + x, attention


if __name__ == "__main__":
    B, C, W = 2, 32, 16
    Cq = C // 8

    key = jax.random.PRNGKey(0)
    kx, kq, kbq, kk, kbk, kv, kbv = jax.random.split(key, 7)

    x = jax.random.normal(kx, (B, C, W), dtype=jnp.float32)
    wq = jax.random.normal(kq, (Cq, C), dtype=jnp.float32) * 0.1
    bq = jax.random.normal(kbq, (Cq,), dtype=jnp.float32) * 0.1
    wk = jax.random.normal(kk, (Cq, C), dtype=jnp.float32) * 0.1
    bk = jax.random.normal(kbk, (Cq,), dtype=jnp.float32) * 0.1
    wv = jax.random.normal(kv, (C, C), dtype=jnp.float32) * 0.1
    bv = jax.random.normal(kbv, (C,), dtype=jnp.float32) * 0.1
    # PyTorch init is gamma = 0; use a nonzero value so the attention path is exercised.
    gamma = jnp.array([0.5], dtype=jnp.float32)

    out, attn = self_attention_1d(x, wq, bq, wk, bk, wv, bv, gamma)
    jax.block_until_ready((out, attn))

    out_ref, attn_ref = reference(x, wq, bq, wk, bk, wv, bv, gamma)
    assert out.shape == (B, C, W) and attn.shape == (B, W, W)
    # Tolerances loosened vs. exact softmax because the kernel uses the EUP
    # approximate reciprocal for the softmax denominator.
    assert jnp.allclose(attn, attn_ref, atol=2e-3, rtol=2e-3)
    assert jnp.allclose(out, out_ref, atol=2e-3, rtol=2e-3)

    print("KERNEL_OK")
</pallas_src>

<mosaic_0001>
module attributes {stable_mosaic.version = 11 : i64} {
  func.func @_self_attention_1d_kernel(%arg0: i32, %arg1: memref<1x16x32xf32, #tpu.memory_space<vmem>>, %arg2: memref<48x32xf32, #tpu.memory_space<vmem>>, %arg3: memref<1x48xf32, #tpu.memory_space<vmem>>, %arg4: memref<1xf32, #tpu.memory_space<smem>>, %arg5: memref<1x16x32xf32, #tpu.memory_space<vmem>>, %arg6: memref<1x16x16xf32, #tpu.memory_space<vmem>>) attributes {dimension_semantics = [#tpu.dimension_semantics<parallel>], iteration_bounds = array<i64: 2>, scalar_prefetch = 0 : i64, scratch_operands = 0 : i64, tpu.core_type = #tpu.core_type<tc>, window_params = [{transform_indices = @transform_0, window_bounds = array<i64: 1, 16, 32>}, {pipeline_mode = #tpu.pipeline_mode<synchronous>, transform_indices = @transform_1, window_bounds = array<i64: 48, 32>}, {pipeline_mode = #tpu.pipeline_mode<synchronous>, transform_indices = @transform_2, window_bounds = array<i64: 1, 48>}, {transform_indices = @transform_3, window_bounds = array<i64: 1>}, {transform_indices = @transform_4, window_bounds = array<i64: 1, 16, 32>}, {transform_indices = @transform_5, window_bounds = array<i64: 1, 16, 16>}]} {
    %c0 = arith.constant 0 : index
    %c0_0 = arith.constant 0 : index
    %c0_1 = arith.constant 0 : index
    %0 = vector.load %arg1[%c0, %c0_0, %c0_1] : memref<1x16x32xf32, #tpu.memory_space<vmem>>, vector<1x16x32xf32>
    %1 = vector.shape_cast %0 : vector<1x16x32xf32> to vector<16x32xf32>
    %c0_2 = arith.constant 0 : index
    %c0_3 = arith.constant 0 : index
    %2 = vector.load %arg2[%c0_2, %c0_3] : memref<48x32xf32, #tpu.memory_space<vmem>>, vector<48x32xf32>
    %cst = arith.constant dense<0.000000e+00> : vector<16x48xf32>
    %3 = tpu.matmul %1, %2, %cst {dimension_numbers = #tpu.dot_dimension_numbers<[1], [1], [0], [0], [0, 0, 1, 0], [], []>} : vector<16x32xf32>, vector<48x32xf32>, vector<16x48xf32> -> vector<16x48xf32>
    %c0_4 = arith.constant 0 : index
    %c0_5 = arith.constant 0 : index
    %4 = vector.load %arg3[%c0_4, %c0_5] : memref<1x48xf32, #tpu.memory_space<vmem>>, vector<1x48xf32>
    %5 = vector.broadcast %4 : vector<1x48xf32> to vector<16x48xf32>
    %6 = arith.addf %3, %5 : vector<16x48xf32>
    %7 = vector.extract_strided_slice %6 {offsets = [0, 0], sizes = [16, 4], strides = [1, 1]} : vector<16x48xf32> to vector<16x4xf32>
    %8 = vector.extract_strided_slice %6 {offsets = [0, 8], sizes = [16, 4], strides = [1, 1]} : vector<16x48xf32> to vector<16x4xf32>
    %9 = vector.extract_strided_slice %6 {offsets = [0, 16], sizes = [16, 32], strides = [1, 1]} : vector<16x48xf32> to vector<16x32xf32>
    %cst_6 = arith.constant dense<0.000000e+00> : vector<16x16xf32>
    %10 = tpu.matmul %7, %8, %cst_6 {dimension_numbers = #tpu.dot_dimension_numbers<[1], [1], [0], [0], [0, 0, 1, 0], [], []>} : vector<16x4xf32>, vector<16x4xf32>, vector<16x16xf32> -> vector<16x16xf32>
    %cst_7 = arith.constant dense<0xFF800000> : vector<16xf32>
    %11 = vector.multi_reduction <maximumf>, %10, %cst_7 [1] : vector<16x16xf32> to vector<16xf32>
    %12 = vector.shape_cast %11 : vector<16xf32> to vector<16x1xf32>
    %13 = vector.broadcast %12 : vector<16x1xf32> to vector<16x16xf32>
    %14 = arith.subf %10, %13 : vector<16x16xf32>
    %15 = math.exp %14 : vector<16x16xf32>
    %cst_8 = arith.constant dense<0.000000e+00> : vector<16xf32>
    %16 = vector.multi_reduction <add>, %15, %cst_8 [1] : vector<16x16xf32> to vector<16xf32>
    %17 = vector.shape_cast %16 : vector<16xf32> to vector<16x1xf32>
    %18 = tpu.reciprocal %17 {approx = true} : vector<16x1xf32> -> vector<16x1xf32>
    %19 = vector.broadcast %18 : vector<16x1xf32> to vector<16x16xf32>
    %20 = arith.mulf %15, %19 : vector<16x16xf32>
    %cst_9 = arith.constant dense<0.000000e+00> : vector<16x32xf32>
    %21 = tpu.matmul %20, %9, %cst_9 {dimension_numbers = #tpu.dot_dimension_numbers<[1], [0], [0], [1], [0, 0, 1, 1], [], []>} : vector<16x16xf32>, vector<16x32xf32>, vector<16x32xf32> -> vector<16x32xf32>
    %c0_10 = arith.constant 0 : index
    %22 = memref.load %arg4[%c0_10] : memref<1xf32, #tpu.memory_space<smem>>
    %23 = vector.broadcast %22 : f32 to vector<16x32xf32>
    %24 = arith.mulf %23, %21 : vector<16x32xf32>
    %25 = arith.addf %24, %1 : vector<16x32xf32>
    %c0_11 = arith.constant 0 : index
    %c0_12 = arith.constant 0 : index
    %c0_13 = arith.constant 0 : index
    %26 = vector.load %arg5[%c0_11, %c0_12, %c0_13] : memref<1x16x32xf32, #tpu.memory_space<vmem>>, vector<1x16x32xf32>
    %27 = vector.shape_cast %26 : vector<1x16x32xf32> to vector<16x32xf32>
    %28 = vector.shape_cast %25 : vector<16x32xf32> to vector<1x16x32xf32>
    tpu.vector_store %arg5[%c0_11, %c0_12, %c0_13], %28 {strides = array<i32>} : memref<1x16x32xf32, #tpu.memory_space<vmem>>, vector<1x16x32xf32>,
    %c0_14 = arith.constant 0 : index
    %c0_15 = arith.constant 0 : index
    %c0_16 = arith.constant 0 : index
    %29 = vector.load %arg6[%c0_14, %c0_15, %c0_16] : memref<1x16x16xf32, #tpu.memory_space<vmem>>, vector<1x16x16xf32>
    %30 = vector.shape_cast %29 : vector<1x16x16xf32> to vector<16x16xf32>
    %31 = vector.shape_cast %20 : vector<16x16xf32> to vector<1x16x16xf32>
    tpu.vector_store %arg6[%c0_14, %c0_15, %c0_16], %31 {strides = array<i32>} : memref<1x16x16xf32, #tpu.memory_space<vmem>>, vector<1x16x16xf32>,
    return
  }
  func.func @transform_0(%arg0: i32) -> (i32, i32, i32) {
    %c0_i32 = arith.constant 0 : i32
    %c0_i32_0 = arith.constant 0 : i32
    %c0_i32_1 = arith.constant 0 : i32
    return %arg0, %c0_i32, %c0_i32_0 : i32, i32, i32
  }
  func.func @transform_1(%arg0: i32) -> (i32, i32) {
    %c0_i32 = arith.constant 0 : i32
    %c0_i32_0 = arith.constant 0 : i32
    %c0_i32_1 = arith.constant 0 : i32
    return %c0_i32, %c0_i32_0 : i32, i32
  }
  func.func @transform_2(%arg0: i32) -> (i32, i32) {
    %c0_i32 = arith.constant 0 : i32
    %c0_i32_0 = arith.constant 0 : i32
    %c0_i32_1 = arith.constant 0 : i32
    return %c0_i32, %c0_i32_0 : i32, i32
  }
  func.func @transform_3(%arg0: i32) -> i32 {
    %c0_i32 = arith.constant 0 : i32
    %c0_i32_0 = arith.constant 0 : i32
    return %c0_i32 : i32
  }
  func.func @transform_4(%arg0: i32) -> (i32, i32, i32) {
    %c0_i32 = arith.constant 0 : i32
    %c0_i32_0 = arith.constant 0 : i32
    %c0_i32_1 = arith.constant 0 : i32
    return %arg0, %c0_i32, %c0_i32_0 : i32, i32, i32
  }
  func.func @transform_5(%arg0: i32) -> (i32, i32, i32) {
    %c0_i32 = arith.constant 0 : i32
    %c0_i32_0 = arith.constant 0 : i32
    %c0_i32_1 = arith.constant 0 : i32
    return %arg0, %c0_i32, %c0_i32_0 : i32, i32, i32
  }
}

</mosaic_0001>

<llo_original>
// kernel: tpu_custom_call.1
$region0: #{tpu_custom_call.1}
  #allocation0 [shape = 'u32[]', space=smem, size = 0x4, offset = 0x4, fixed_abs, tag = 'smem constant byte address 0x4 - core index']
  #allocation1 [shape = 'u32[144,128]{1,0:T(1,128)}', space=vmem, size = 0x12000, scoped, tag = 'internal scratch']
  #allocation2 [shape = 'f32[1]{0:T(128)S(6)}', space=smem, size = 0x200, scoped, tag = 'scoped memory for tpu_custom_call.1']
  %s0 = inlined_call_operand.vmem [shape: f32[2,16,32], index: 0, kind: input, shape index: {}]
  %s1 = inlined_call_operand.vmem [shape: f32[48,32], index: 1, kind: input, shape index: {}]
  %s2 = inlined_call_operand.vmem [shape: f32[1,48], index: 2, kind: input, shape index: {}]
  %s3 = inlined_call_operand.<no memory space> [shape: f32[1], index: 3, kind: input, shape index: {}]
  %s4 = inlined_call_operand.hbm [shape: f32[2,16,32], index: 4, kind: output, shape index: {0}]
  %s5 = inlined_call_operand.hbm [shape: f32[2,16,16], index: 5, kind: output, shape index: {1}]
  %6 = xla_tuple %s4, %s5
  %s7 = sld [smem:[#allocation0]]
  $region57: #{tpu_custom_call.1} parent=0
    _
  %s9 = ssub.s32 1, %s7
  %s10 = scalar_select 0, %s9, %s7
  %11 = sst [smem:[#allocation2]] %s3
  $region1: #{tpu_custom_call.1} parent=0
    #allocation3 [shape = 'u8[16384]{0}', space=vmem, size = 0x4000, scoped, tag = 'output window, operand 0']
    #allocation4 [shape = 's32[2]{0}', space=sflag, size = 0x8, scoped, tag = 'scoped memory for tpu_custom_call.1']
    #allocation5 [shape = 'u8[16384]{0}', space=vmem, size = 0x4000, scoped, tag = 'output window, operand 1']
    #allocation6 [shape = 's32[2]{0}', space=sflag, size = 0x8, scoped, tag = 'scoped memory for tpu_custom_call.1']
    %12 = vsyncpa [#allocation4], 0
    %s13 = scalar_lea.sflag [#allocation4], 1
    %14 = vsyncpa %s13, 0
    %15 = vsyncpa [#allocation6], 0
    %s16 = scalar_lea.sflag [#allocation6], 1
    %17 = vsyncpa %s16, 0
    loop: start=0, step=1, limit=4
    $region2: #{tpu_custom_call.1} parent=1 // loop_pre_header
      _
    $region3: #{tpu_custom_call.1} parent=1 // loop_header
      %s19 = sphi 0, %s23
      %p20 = scmp.ge.s32.totalorder %s19, 4
      %s29 = sphi 0, %s31
      %s32 = sphi 0, %s29
      %s33 = sphi 0, %s32
      %s49 = sphi 0, %s33
      %s53 = sphi 0, %s53
      %s55 = sphi 0, %s53
      %s56 = sphi 0, %s55
      %s70 = sphi 0, %s56
      %s74 = sphi 0, %s74
      %s76 = sphi 0, %s74
      %s77 = sphi 0, %s76
      %s91 = sphi 0, %s77
      %s95 = sphi 0, %s95
      %s97 = sphi 0, %s95
      %s98 = sphi 0, %s97
      %s112 = sphi 0, %s98
      %s118 = sphi 0, %s120
      %s121 = sphi 0, %s118
      %s122 = sphi 0, %s121
      %s138 = sphi 0, %s122
      %s144 = sphi 0, %s146
      %s147 = sphi 0, %s144
      %s148 = sphi 0, %s147
      %s164 = sphi 0, %s148
    $region4: #{tpu_custom_call.1} parent=1 // loop_header_branch
      %22 = sbr.rel (%p20) target = $region8
    $region5: #{tpu_custom_call.1} parent=1 // loop_body
      %s24 = ssub.s32 %s19, 1
      %s25 = ssub.s32 %s19, 2
      %s26 = sadd.s32 %s19, 1
      %s27 = ssub.s32 %s19, %s26
      %p28 = scmp.eq.s32.totalorder %s27, 0
      %s30 = sadd.s32 %s29, 1
      %s31 = scalar_select %p28, %s29, %s30
      %p34 = pneg %p28
      %p35 = scmp.eq.s32.totalorder %s19, 1
      %p36 = por %p34, %p35
      %p37 = scmp.ne.s32.totalorder %s29, %s32
      %p38 = scmp.eq.s32.totalorder %s19, 0
      %p39 = por %p37, %p38
      %p40 = scmp.ne.s32.totalorder %s29, %s32
      %p41 = scmp.eq.s32.totalorder %s24, 1
      %p42 = por %p40, %p41
      %p43 = scmp.ne.s32.totalorder %s32, %s33
      %p44 = scmp.eq.s32.totalorder %s24, 0
      %p45 = por %p43, %p44
      %p46 = scmp.ne.s32.totalorder %s32, %s33
      %p47 = scmp.eq.s32.totalorder %s25, 1
      %p48 = por %p46, %p47
      %p50 = scmp.ne.s32.totalorder %s33, %s49
      %p51 = scmp.eq.s32.totalorder %s25, 0
      %p52 = por %p50, %p51
      %s54 = sadd.s32 %s53, 1
      %p57 = scmp.eq.s32.totalorder %s19, 1
      %p58 = scmp.ne.s32.totalorder %s53, %s55
      %p59 = scmp.eq.s32.totalorder %s19, 0
      %p60 = por %p58, %p59
      %p61 = scmp.ne.s32.totalorder %s53, %s55
      %p62 = scmp.eq.s32.totalorder %s24, 1
      %p63 = por %p61, %p62
      %p64 = scmp.ne.s32.totalorder %s55, %s56
      %p65 = scmp.eq.s32.totalorder %s24, 0
      %p66 = por %p64, %p65
      %p67 = scmp.ne.s32.totalorder %s55, %s56
      %p68 = scmp.eq.s32.totalorder %s25, 1
      %p69 = por %p67, %p68
      %p71 = scmp.ne.s32.totalorder %s56, %s70
      %p72 = scmp.eq.s32.totalorder %s25, 0
      %p73 = por %p71, %p72
      %s75 = sadd.s32 %s74, 1
      %p78 = scmp.eq.s32.totalorder %s19, 1
      %p79 = scmp.ne.s32.totalorder %s74, %s76
      %p80 = scmp.eq.s32.totalorder %s19, 0
      %p81 = por %p79, %p80
      %p82 = scmp.ne.s32.totalorder %s74, %s76
      %p83 = scmp.eq.s32.totalorder %s24, 1
      %p84 = por %p82, %p83
      %p85 = scmp.ne.s32.totalorder %s76, %s77
      %p86 = scmp.eq.s32.totalorder %s24, 0
      %p87 = por %p85, %p86
      %p88 = scmp.ne.s32.totalorder %s76, %s77
      %p89 = scmp.eq.s32.totalorder %s25, 1
      %p90 = por %p88, %p89
      %p92 = scmp.ne.s32.totalorder %s77, %s91
      %p93 = scmp.eq.s32.totalorder %s25, 0
      %p94 = por %p92, %p93
      %s96 = sadd.s32 %s95, 1
      %p99 = scmp.eq.s32.totalorder %s19, 1
      %p100 = scmp.ne.s32.totalorder %s95, %s97
      %p101 = scmp.eq.s32.totalorder %s19, 0
      %p102 = por %p100, %p101
      %p103 = scmp.ne.s32.totalorder %s95, %s97
      %p104 = scmp.eq.s32.totalorder %s24, 1
      %p105 = por %p103, %p104
      %p106 = scmp.ne.s32.totalorder %s97, %s98
      %p107 = scmp.eq.s32.totalorder %s24, 0
      %p108 = por %p106, %p107
      %p109 = scmp.ne.s32.totalorder %s97, %s98
      %p110 = scmp.eq.s32.totalorder %s25, 1
      %p111 = por %p109, %p110
      %p113 = scmp.ne.s32.totalorder %s98, %s112
      %p114 = scmp.eq.s32.totalorder %s25, 0
      %p115 = por %p113, %p114
      %s116 = ssub.s32 %s19, %s26
      %p117 = scmp.eq.s32.totalorder %s116, 0
      %s119 = sadd.s32 %s118, 1
      %s120 = scalar_select %p117, %s118, %s119
      %p123 = pneg %p117
      %p124 = scmp.eq.s32.totalorder %s19, 1
      %p125 = por %p123, %p124
      %p126 = scmp.ne.s32.totalorder %s118, %s121
      %p127 = scmp.eq.s32.totalorder %s19, 0
      %p128 = por %p126, %p127
      %p129 = scmp.ne.s32.totalorder %s118, %s121
      %p130 = scmp.eq.s32.totalorder %s24, 1
      %p131 = por %p129, %p130
      %p132 = scmp.ne.s32.totalorder %s121, %s122
      %p133 = scmp.eq.s32.totalorder %s24, 0
      %p134 = por %p132, %p133
      %p135 = scmp.ne.s32.totalorder %s121, %s122
      %p136 = scmp.eq.s32.totalorder %s25, 1
      %p137 = por %p135, %p136
      %p139 = scmp.ne.s32.totalorder %s122, %s138
      %p140 = scmp.eq.s32.totalorder %s25, 0
      %p141 = por %p139, %p140
      %s142 = ssub.s32 %s19, %s26
      %p143 = scmp.eq.s32.totalorder %s142, 0
      %s145 = sadd.s32 %s144, 1
      %s146 = scalar_select %p143, %s144, %s145
      %p149 = pneg %p143
      %p150 = scmp.eq.s32.totalorder %s19, 1
      %p151 = por %p149, %p150
      %p152 = scmp.ne.s32.totalorder %s144, %s147
      %p153 = scmp.eq.s32.totalorder %s19, 0
      %p154 = por %p152, %p153
      %p155 = scmp.ne.s32.totalorder %s144, %s147
      %p156 = scmp.eq.s32.totalorder %s24, 1
      %p157 = por %p155, %p156
      %p158 = scmp.ne.s32.totalorder %s147, %s148
      %p159 = scmp.eq.s32.totalorder %s24, 0
      %p160 = por %p158, %p159
      %p161 = scmp.ne.s32.totalorder %s147, %s148
      %p162 = scmp.eq.s32.totalorder %s25, 1
      %p163 = por %p161, %p162
      %p165 = scmp.ne.s32.totalorder %s148, %s164
      %p166 = scmp.eq.s32.totalorder %s25, 0
      %p167 = por %p165, %p166
      %p168 = scmp.le.s32.totalorder 1, %s19
      %p169 = scmp.lt.s32.totalorder %s19, 3
      %p170 = pnand %p168, %p169
      %p171 = pneg %p170
      // Predicated region
      $region9: #{tpu_custom_call.1} parent=5 // pred_check
        _
      $region10: #{tpu_custom_call.1} parent=5 // pred_check_branch
        %173 = sbr.rel (%p170) target = $region12
      $region11: #{tpu_custom_call.1} parent=5 // pred_region
        %s174 = ssub.s32 %s19, 1
        // Predicated region
        $region13: #{tpu_custom_call.1} parent=11 // pred_check
          %p175 = pneg %p66
        $region14: #{tpu_custom_call.1} parent=11 // pred_check_branch
          %177 = sbr.rel (%p175) target = $region16
        $region15: #{tpu_custom_call.1} parent=11 // pred_region
          _
        $region16: #{tpu_custom_call.1} parent=11 // pred_fallthru
          _
        // Predicated region
        $region17: #{tpu_custom_call.1} parent=11 // pred_check
          %p178 = pneg %p87
        $region18: #{tpu_custom_call.1} parent=11 // pred_check_branch
          %180 = sbr.rel (%p178) target = $region20
        $region19: #{tpu_custom_call.1} parent=11 // pred_region
          _
        $region20: #{tpu_custom_call.1} parent=11 // pred_fallthru
          _
        // Predicated region
        $region21: #{tpu_custom_call.1} parent=11 // pred_check
          %p181 = pneg %p108
        $region22: #{tpu_custom_call.1} parent=11 // pred_check_branch
          %183 = sbr.rel (%p181) target = $region24
        $region23: #{tpu_custom_call.1} parent=11 // pred_region
          _
        $region24: #{tpu_custom_call.1} parent=11 // pred_fallthru
          _
      $region12: #{tpu_custom_call.1} parent=5 // pred_fallthru
        _
      %p184 = scmp.lt.s32.totalorder %s19, 2
      // Predicated region
      $region25: #{tpu_custom_call.1} parent=5 // pred_check
        %p185 = pneg %p184
      $region26: #{tpu_custom_call.1} parent=5 // pred_check_branch
        %187 = sbr.rel (%p185) target = $region28
      $region27: #{tpu_custom_call.1} parent=5 // pred_region
        // Predicated region
        $region29: #{tpu_custom_call.1} parent=27 // pred_check
          %p188 = pneg %p39
        $region30: #{tpu_custom_call.1} parent=27 // pred_check_branch
          %190 = sbr.rel (%p188) target = $region32
        $region31: #{tpu_custom_call.1} parent=27 // pred_region
          %p191 = scmp.lt.s32.totalorder %s19, 1
          %s192 = scalar_select %p191, %s19, 1
          %s193 = smul.addr %s192, 2
          %s194 = smul.addr %s193, 8
          %s195 = scalar_lea.vmem %s0, %s194
        $region32: #{tpu_custom_call.1} parent=27 // pred_fallthru
          _
      $region28: #{tpu_custom_call.1} parent=5 // pred_fallthru
        _
      %p196 = scmp.le.s32.totalorder 1, %s19
      %p197 = scmp.lt.s32.totalorder %s19, 3
      %p198 = pnand %p196, %p197
      %p199 = pneg %p198
      // Predicated region
      $region33: #{tpu_custom_call.1} parent=5 // pred_check
        _
      $region34: #{tpu_custom_call.1} parent=5 // pred_check_branch
        %201 = sbr.rel (%p198) target = $region36
      $region35: #{tpu_custom_call.1} parent=5 // pred_region
        %s202 = ssub.s32 %s19, 1
        %p203 = scmp.lt.s32.totalorder %s24, 1
        %s204 = scalar_select %p203, %s24, 1
        %s205 = smul.addr %s204, 2
        %s206 = smul.addr %s205, 8
        %s207 = scalar_lea.vmem %s0, %s206
        %p208 = pneg %p45
        %p209 = pneg %p42
        %p210 = pneg %p66
        %p211 = pneg %p63
        %p212 = pneg %p87
        %p213 = pneg %p84
        %p214 = pneg %p108
        %p215 = pneg %p105
        %p216 = pneg %p134
        %p217 = pneg %p131
        %s218 = sand.u32 %s121, 1
        %s219 = scalar_lea.sflag [#allocation4], %s218
        %s220 = sand.u32 %s121, 1
        %s221 = smul.addr %s220, 16
        %s222 = scalar_lea.vmem [#allocation3], %s221
        %p223 = pneg %p160
        %p224 = pneg %p157
        %s225 = sand.u32 %s147, 1
        %s226 = scalar_lea.sflag [#allocation6], %s225
        %s227 = sand.u32 %s147, 1
        %s228 = smul.addr %s227, 16
        %s229 = scalar_lea.vmem [#allocation5], %s228
        %p230 = scmp.lt.s32.totalorder %s24, 1
        %s231 = scalar_select %p230, %s24, 1
        %s232 = smul.addr %s231, 2
        %s233 = smul.addr %s232, 8
        %s234 = scalar_lea.vmem %s0, %s233
        %v235 = vld [vmem:[%s234] sm:$0xff]
        %v236 = vld [vmem:[%s234 + $0x8] sm:$0xff]
        %v237 = vld [vmem:[%s1] sm:$0xff]
        %v238 = vld [vmem:[%s1 + $0x8] sm:$0xff]
        %v239 = vld [vmem:[%s1 + $0x10] sm:$0xff]
        %v240 = vld [vmem:[%s1 + $0x18] sm:$0xff]
        %v241 = vld [vmem:[%s1 + $0x20] sm:$0xff]
        %v242 = vld [vmem:[%s1 + $0x28] sm:$0xff]
        %v243 = vld [vmem:[%s2] sm:$0x1]
        %v245 = vlaneseq
        %v246 = vshrl.u32 %v245, 7
        %v247 = vsub.s32 0, %v246
        %v248 = vrot.slane %v243, %v247
        %vm250 = vcmask 261120
        %v252 = vsel %vm250, %v235, 0
        %v255 = vsel %vm250, %v236, 0
        %v258 = vsel %vm250, %v237, 0
        %v261 = vsel %vm250, %v238, 0
        %v264 = vsel %vm250, %v239, 0
        %v267 = vsel %vm250, %v240, 0
        %v270 = vsel %vm250, %v241, 0
        %v273 = vsel %vm250, %v242, 0
        %275 = vmatprep.subr.mxu0 0.0
        %276 = vmatpush1.xpose.msra.mxu0 %v258
        %277 = vmatprep.subr.mxu0 0.0
        %278 = vmatpush1.xpose.msra.mxu0 %v261
        %279 = vmatprep.subr.mxu0 0.0
        %280 = vmatpush1.xpose.msra.mxu0 %v264
        %281 = vmatprep.subr.mxu0 0.0
        %282 = vmatpush1.xpose.msra.mxu0 %v267
        %283 = vmatprep.subr.mxu0 0.0
        %284 = vmatpush1.xpose.msra.mxu0 %v270
        %285 = vmatprep.subr.mxu0 0.0
        %286 = vmatpush1.xpose.msra.mxu0 %v273
        %287 = vmatprep.subr.mxu0 0.0
        %288 = vmatpush1.xpose.msra.mxu0 0.0
        %289 = vmatprep.subr.mxu0 0.0
        %290 = vmatpush1.xpose.msra.mxu0 0.0
        %291 = vmatprep.subr.mxu0 0.0
        %292 = vmatpush1.xpose.msra.mxu0 0.0
        %293 = vmatprep.subr.mxu0 0.0
        %294 = vmatpush1.xpose.msra.mxu0 0.0
        %295 = vmatprep.subr.mxu0 0.0
        %296 = vmatpush1.xpose.msra.mxu0 0.0
        %297 = vmatprep.subr.mxu0 0.0
        %298 = vmatpush1.xpose.msra.mxu0 0.0
        %299 = vmatprep.subr.mxu0 0.0
        %300 = vmatpush1.xpose.msra.mxu0 0.0
        %301 = vmatprep.subr.mxu0 0.0
        %302 = vmatpush1.xpose.msra.mxu0 0.0
        %303 = vmatprep.subr.mxu0 0.0
        %304 = vmatpush1.xpose.msra.mxu0 0.0
        %305 = vmatprep.subr.mxu0 0.0
        %306 = vmatpush1.xpose.msra.mxu0 0.0
        %307 = vmatprep.subr.mxu0 0.0
        %308 = vmatpush1.xpose.msra.mxu0 0.0
        %309 = vmatprep.subr.mxu0 0.0
        %310 = vmatpush1.xpose.msra.mxu0 0.0
        %311 = vmatprep.subr.mxu0 0.0
        %312 = vmatpush1.xpose.msra.mxu0 0.0
        %313 = vmatprep.subr.mxu0 0.0
        %314 = vmatpush1.xpose.msra.mxu0 0.0
        %315 = vmatprep.subr.mxu0 0.0
        %316 = vmatpush1.xpose.msra.mxu0 0.0
        %317 = vmatprep.subr.mxu0 0.0
        %318 = vmatpush1.xpose.msra.mxu0 0.0
        %319 = vmatprep.subr.mxu0 0.0
        %320 = vmatpush1.xpose.msra.mxu0 0.0
        %321 = vmatprep.subr.mxu0 0.0
        %322 = vmatpush1.xpose.msra.mxu0 0.0
        %323 = vmatprep.subr.mxu0 0.0
        %324 = vmatpush1.xpose.msra.mxu0 0.0
        %325 = vmatprep.subr.mxu0 0.0
        %326 = vmatpush1.xpose.msra.mxu0 0.0
        %327 = vmatprep.subr.mxu0 0.0
        %328 = vmatpush1.xpose.msra.mxu0 0.0
        %329 = vmatprep.subr.mxu0 0.0
        %330 = vmatpush1.xpose.msra.mxu0 0.0
        %331 = vmatprep.subr.mxu0 0.0
        %332 = vmatpush1.xpose.msra.mxu0 0.0
        %333 = vmatprep.subr.mxu0 0.0
        %334 = vmatpush1.xpose.msra.mxu0 0.0
        %335 = vmatprep.subr.mxu0 0.0
        %336 = vmatpush1.xpose.msra.mxu0 0.0
        %337 = vmatprep.subr.mxu0 0.0
        %338 = vmatpush1.xpose.msra.mxu0 0.0
        %339 = vmatprep.mubr.f32.mxu0 0.0
        %340 = vmatmul.mubr.f32.gmra.mrb[0].mxu0 %v252
        %v341 = vpop.f32.mrb[0].mxu0
        %v342 = vadd.f32 %v248, %v341
        %v343 = vpop.f32.mrb[0].mxu0
        %344 = vmatprep.mubr.f32.mxu0 0.0
        %345 = vmatmul.mubr.f32.gmra.mrb[0].mxu0 %v255
        %v346 = vpop.f32.mrb[0].mxu0
        %v347 = vadd.f32 %v248, %v346
        %v348 = vpop.f32.mrb[0].mxu0
        %349 = vdwg.mxu0
        %352 = vrot.lane.b32.xlu0 %v342, 120
        %v353 = vpop.permute.xlu0 %352
        %354 = vrot.lane.b32.xlu0 %v347, 120
        %v355 = vpop.permute.xlu0 %354
        %vm356 = vcmask 31744
        %v357 = vsel %vm356, %v342, 0
        %v359 = vsel %vm356, %v347, 0
        %v361 = vsel %vm356, %v353, 0
        %v363 = vsel %vm356, %v355, 0
        %365 = vmatprep.subr.mxu0 0.0
        %366 = vmatpush1.xpose.msra.mxu0 %v361
        %367 = vmatprep.subr.mxu0 0.0
        %368 = vmatpush1.xpose.msra.mxu0 %v363
        %369 = vmatprep.subr.mxu0 0.0
        %370 = vmatpush1.xpose.msra.mxu0 0.0
        %371 = vmatprep.subr.mxu0 0.0
        %372 = vmatpush1.xpose.msra.mxu0 0.0
        %373 = vmatprep.subr.mxu0 0.0
        %374 = vmatpush1.xpose.msra.mxu0 0.0
        %375 = vmatprep.subr.mxu0 0.0
        %376 = vmatpush1.xpose.msra.mxu0 0.0
        %377 = vmatprep.subr.mxu0 0.0
        %378 = vmatpush1.xpose.msra.mxu0 0.0
        %379 = vmatprep.subr.mxu0 0.0
        %380 = vmatpush1.xpose.msra.mxu0 0.0
        %381 = vmatprep.subr.mxu0 0.0
        %382 = vmatpush1.xpose.msra.mxu0 0.0
        %383 = vmatprep.subr.mxu0 0.0
        %384 = vmatpush1.xpose.msra.mxu0 0.0
        %385 = vmatprep.subr.mxu0 0.0
        %386 = vmatpush1.xpose.msra.mxu0 0.0
        %387 = vmatprep.subr.mxu0 0.0
        %388 = vmatpush1.xpose.msra.mxu0 0.0
        %389 = vmatprep.subr.mxu0 0.0
        %390 = vmatpush1.xpose.msra.mxu0 0.0
        %391 = vmatprep.subr.mxu0 0.0
        %392 = vmatpush1.xpose.msra.mxu0 0.0
        %393 = vmatprep.subr.mxu0 0.0
        %394 = vmatpush1.xpose.msra.mxu0 0.0
        %395 = vmatprep.subr.mxu0 0.0
        %396 = vmatpush1.xpose.msra.mxu0 0.0
        %397 = vmatprep.subr.mxu0 0.0
        %398 = vmatpush1.xpose.msra.mxu0 0.0
        %399 = vmatprep.subr.mxu0 0.0
        %400 = vmatpush1.xpose.msra.mxu0 0.0
        %401 = vmatprep.subr.mxu0 0.0
        %402 = vmatpush1.xpose.msra.mxu0 0.0
        %403 = vmatprep.subr.mxu0 0.0
        %404 = vmatpush1.xpose.msra.mxu0 0.0
        %405 = vmatprep.subr.mxu0 0.0
        %406 = vmatpush1.xpose.msra.mxu0 0.0
        %407 = vmatprep.subr.mxu0 0.0
        %408 = vmatpush1.xpose.msra.mxu0 0.0
        %409 = vmatprep.subr.mxu0 0.0
        %410 = vmatpush1.xpose.msra.mxu0 0.0
        %411 = vmatprep.subr.mxu0 0.0
        %412 = vmatpush1.xpose.msra.mxu0 0.0
        %413 = vmatprep.subr.mxu0 0.0
        %414 = vmatpush1.xpose.msra.mxu0 0.0
        %415 = vmatprep.subr.mxu0 0.0
        %416 = vmatpush1.xpose.msra.mxu0 0.0
        %417 = vmatprep.subr.mxu0 0.0
        %418 = vmatpush1.xpose.msra.mxu0 0.0
        %419 = vmatprep.subr.mxu0 0.0
        %420 = vmatpush1.xpose.msra.mxu0 0.0
        %421 = vmatprep.subr.mxu0 0.0
        %422 = vmatpush1.xpose.msra.mxu0 0.0
        %423 = vmatprep.subr.mxu0 0.0
        %424 = vmatpush1.xpose.msra.mxu0 0.0
        %425 = vmatprep.subr.mxu0 0.0
        %426 = vmatpush1.xpose.msra.mxu0 0.0
        %427 = vmatprep.subr.mxu0 0.0
        %428 = vmatpush1.xpose.msra.mxu0 0.0
        %429 = vmatprep.mubr.f32.mxu0 0.0
        %430 = vmatmul.mubr.f32.gmra.mrb[0].mxu0 %v357
        %v431 = vpop.f32.mrb[0].mxu0
        %v432 = vadd.f32 0.0, %v431
        %v433 = vpop.f32.mrb[0].mxu0
        %434 = vmatprep.mubr.f32.mxu0 0.0
        %435 = vmatmul.mubr.f32.gmra.mrb[0].mxu0 %v359
        %v436 = vpop.f32.mrb[0].mxu0
        %v437 = vadd.f32 0.0, %v436
        %v438 = vpop.f32.mrb[0].mxu0
        %439 = vdwg.mxu0
        %vm440 = vcmask 130048
        %v441 = vsel %vm440, %v432, -inf
        %442 = vmax.xlane.f32.xlu0 %v441
        %v443 = vpop.xlane.xlu0 %442
        %v444 = vsel %vm440, %v437, -inf
        %445 = vmax.xlane.f32.xlu0 %v444
        %v446 = vpop.xlane.xlu0 %445
        %v447 = vsub.f32 %v432, %v443
        %v448 = vsub.f32 %v437, %v446
        %v449 = vmul.f32 %v447, 1.442695
        %v450 = vpow.pop %v449
        %v451 = vmul.f32 %v448, 1.442695
        %v452 = vpow.pop %v451
        %v453 = vsel %vm440, %v450, 0.0
        %454 = vadd.xlane.f32.xlu0 %v453
        %v455 = vpop.xlane.xlu0 %454
        %v456 = vsel %vm440, %v452, 0.0
        %457 = vadd.xlane.f32.xlu0 %v456
        %v458 = vpop.xlane.xlu0 %457
        %v459 = vrcp.pop %v455
        %v460 = vrcp.pop %v458
        %v461 = vmul.f32 %v450, %v459
        %v462 = vmul.f32 %v452, %v460
        %463 = vrot.lane.b32.xlu0 %v342, 112
        %v464 = vpop.permute.xlu0 %463
        %465 = vrot.lane.b32.xlu0 %v347, 112
        %v466 = vpop.permute.xlu0 %465
        %v470 = vsel %vm440, %v461, 0
        %v473 = vsel %vm440, %v462, 0
        %475 = vmatprep.subr.mxu0 0.0
        %476 = vmatpush1.msra.mxu0 %v464
        %477 = vmatprep.subr.mxu0 0.0
        %478 = vmatpush1.msra.mxu0 %v466
        %479 = vmatprep.subr.mxu0 0.0
        %480 = vmatpush1.msra.mxu0 0.0
        %481 = vmatprep.subr.mxu0 0.0
        %482 = vmatpush1.msra.mxu0 0.0
        %483 = vmatprep.subr.mxu0 0.0
        %484 = vmatpush1.msra.mxu0 0.0
        %485 = vmatprep.subr.mxu0 0.0
        %486 = vmatpush1.msra.mxu0 0.0
        %487 = vmatprep.subr.mxu0 0.0
        %488 = vmatpush1.msra.mxu0 0.0
        %489 = vmatprep.subr.mxu0 0.0
        %490 = vmatpush1.msra.mxu0 0.0
        %491 = vmatprep.subr.mxu0 0.0
        %492 = vmatpush1.msra.mxu0 0.0
        %493 = vmatprep.subr.mxu0 0.0
        %494 = vmatpush1.msra.mxu0 0.0
        %495 = vmatprep.subr.mxu0 0.0
        %496 = vmatpush1.msra.mxu0 0.0
        %497 = vmatprep.subr.mxu0 0.0
        %498 = vmatpush1.msra.mxu0 0.0
        %499 = vmatprep.subr.mxu0 0.0
        %500 = vmatpush1.msra.mxu0 0.0
        %501 = vmatprep.subr.mxu0 0.0
        %502 = vmatpush1.msra.mxu0 0.0
        %503 = vmatprep.subr.mxu0 0.0
        %504 = vmatpush1.msra.mxu0 0.0
        %505 = vmatprep.subr.mxu0 0.0
        %506 = vmatpush1.msra.mxu0 0.0
        %507 = vmatprep.subr.mxu0 0.0
        %508 = vmatpush1.msra.mxu0 0.0
        %509 = vmatprep.subr.mxu0 0.0
        %510 = vmatpush1.msra.mxu0 0.0
        %511 = vmatprep.subr.mxu0 0.0
        %512 = vmatpush1.msra.mxu0 0.0
        %513 = vmatprep.subr.mxu0 0.0
        %514 = vmatpush1.msra.mxu0 0.0
        %515 = vmatprep.subr.mxu0 0.0
        %516 = vmatpush1.msra.mxu0 0.0
        %517 = vmatprep.subr.mxu0 0.0
        %518 = vmatpush1.msra.mxu0 0.0
        %519 = vmatprep.subr.mxu0 0.0
        %520 = vmatpush1.msra.mxu0 0.0
        %521 = vmatprep.subr.mxu0 0.0
        %522 = vmatpush1.msra.mxu0 0.0
        %523 = vmatprep.subr.mxu0 0.0
        %524 = vmatpush1.msra.mxu0 0.0
        %525 = vmatprep.subr.mxu0 0.0
        %526 = vmatpush1.msra.mxu0 0.0
        %527 = vmatprep.subr.mxu0 0.0
        %528 = vmatpush1.msra.mxu0 0.0
        %529 = vmatprep.subr.mxu0 0.0
        %530 = vmatpush1.msra.mxu0 0.0
        %531 = vmatprep.subr.mxu0 0.0
        %532 = vmatpush1.msra.mxu0 0.0
        %533 = vmatprep.subr.mxu0 0.0
        %534 = vmatpush1.msra.mxu0 0.0
        %535 = vmatprep.subr.mxu0 0.0
        %536 = vmatpush1.msra.mxu0 0.0
        %537 = vmatprep.subr.mxu0 0.0
        %538 = vmatpush1.msra.mxu0 0.0
        %539 = vmatprep.mubr.f32.mxu0 0.0
        %540 = vmatmul.mubr.f32.gmra.mrb[0].mxu0 %v470
        %v541 = vpop.f32.mrb[0].mxu0
        %v542 = vadd.f32 0.0, %v541
        %v543 = vpop.f32.mrb[0].mxu0
        %544 = vmatprep.mubr.f32.mxu0 0.0
        %545 = vmatmul.mubr.f32.gmra.mrb[0].mxu0 %v473
        %v546 = vpop.f32.mrb[0].mxu0
        %v547 = vadd.f32 0.0, %v546
        %v548 = vpop.f32.mrb[0].mxu0
        %549 = vdwg.mxu0
        %s550 = sld [smem:[#allocation2]]
        %v551 = vstv %s550
        %v552 = vmul.f32 %v551, %v542
        %v553 = vmul.f32 %v551, %v547
        %v554 = vadd.f32 %v552, %v235
        %v555 = vadd.f32 %v553, %v236
        %556 = vst.msk [vmem:[%s222] sm:$0xff] %vm250, %v554
        %557 = vst.msk [vmem:[%s222 + $0x8] sm:$0xff] %vm250, %v555
        %558 = vst.msk [vmem:[%s229] sm:$0xff] %vm440, %v461
        %559 = vst.msk [vmem:[%s229 + $0x8] sm:$0xff] %vm440, %v462
        %s560 = sand.u32 %s121, 1
        %s561 = scalar_lea.sflag [#allocation4], %s560
        %s562 = sand.u32 %s121, 1
        %s563 = smul.addr %s562, 16
        %s564 = scalar_lea.vmem [#allocation3], %s563
        %s565 = sand.u32 %s147, 1
        %s566 = scalar_lea.sflag [#allocation6], %s565
        %s567 = sand.u32 %s147, 1
        %s568 = smul.addr %s567, 16
        %s569 = scalar_lea.vmem [#allocation5], %s568
        // Predicated region
        $region37: #{tpu_custom_call.1} parent=35 // pred_check
          %p570 = pneg %p131
        $region38: #{tpu_custom_call.1} parent=35 // pred_check_branch
          %572 = sbr.rel (%p570) target = $region40
        $region39: #{tpu_custom_call.1} parent=35 // pred_region
          %s574 = ssub.s32 256, 256
          %575 = vsyncadd %s561, %s574
          %s576 = smul.addr %s24, 2
          %s577 = smul.addr %s576, 128
          %s578 = scalar_lea.hbm %s4, %s577
          %s579 = sshll.u32 %s564, 4
          %s580 = int_to_ptr.vmem [resolvable:$true] %s579
          %585 = dma.vmem_to_hbm [thread:$0]  %s580, 256, %s578, %s561, 128, 128, 8
        $region40: #{tpu_custom_call.1} parent=35 // pred_fallthru
          _
        // Predicated region
        $region41: #{tpu_custom_call.1} parent=35 // pred_check
          %p586 = pneg %p157
        $region42: #{tpu_custom_call.1} parent=35 // pred_check_branch
          %588 = sbr.rel (%p586) target = $region44
        $region43: #{tpu_custom_call.1} parent=35 // pred_region
          %s590 = ssub.s32 256, 256
          %591 = vsyncadd %s566, %s590
          %s592 = smul.addr %s24, 2
          %s593 = smul.addr %s592, 128
          %s594 = scalar_lea.hbm %s5, %s593
          %s595 = sshll.u32 %s569, 4
          %s596 = int_to_ptr.vmem [resolvable:$true] %s595
          %601 = dma.vmem_to_hbm [thread:$0]  %s596, 256, %s594, %s566, 128, 128, 8
        $region44: #{tpu_custom_call.1} parent=35 // pred_fallthru
          _
      $region36: #{tpu_custom_call.1} parent=5 // pred_fallthru
        _
      %p602 = scmp.le.s32.totalorder 2, %s19
      // Predicated region
      $region45: #{tpu_custom_call.1} parent=5 // pred_check
        %p603 = pneg %p602
      $region46: #{tpu_custom_call.1} parent=5 // pred_check_branch
        %605 = sbr.rel (%p603) target = $region48
      $region47: #{tpu_custom_call.1} parent=5 // pred_region
        %s606 = ssub.s32 %s19, 2
        // Predicated region
        $region49: #{tpu_custom_call.1} parent=47 // pred_check
          %p607 = pneg %p137
        $region50: #{tpu_custom_call.1} parent=47 // pred_check_branch
          %609 = sbr.rel (%p607) target = $region52
        $region51: #{tpu_custom_call.1} parent=47 // pred_region
          %s610 = sand.u32 %s122, 1
          %s611 = scalar_lea.sflag [#allocation4], %s610
          %s612 = sand.u32 %s122, 1
          %s613 = smul.addr %s612, 16
          %s614 = scalar_lea.vmem [#allocation3], %s613
          %615 = dma.done %s611, 256
        $region52: #{tpu_custom_call.1} parent=47 // pred_fallthru
          _
        // Predicated region
        $region53: #{tpu_custom_call.1} parent=47 // pred_check
          %p616 = pneg %p163
        $region54: #{tpu_custom_call.1} parent=47 // pred_check_branch
          %618 = sbr.rel (%p616) target = $region56
        $region55: #{tpu_custom_call.1} parent=47 // pred_region
          %s619 = sand.u32 %s148, 1
          %s620 = scalar_lea.sflag [#allocation6], %s619
          %s621 = sand.u32 %s148, 1
          %s622 = smul.addr %s621, 16
          %s623 = scalar_lea.vmem [#allocation5], %s622
          %624 = dma.done %s620, 256
        $region56: #{tpu_custom_call.1} parent=47 // pred_fallthru
          _
      $region48: #{tpu_custom_call.1} parent=5 // pred_fallthru
        _
    $region6: #{tpu_custom_call.1} parent=1 // loop_footer
      %s23 = sadd.s32 1, %s19
    $region7: #{tpu_custom_call.1} parent=1 // loop_footer_branch
      %18 = sbr.rel target = $region3
    $region8: #{tpu_custom_call.1} parent=1 // loop_exit
      _
    %625 = vsyncpa [#allocation4], 1
    %s626 = scalar_lea.sflag [#allocation4], 1
    %627 = vsyncpa %s626, 1
    %628 = vsyncpa [#allocation6], 1
    %s629 = scalar_lea.sflag [#allocation6], 1
    %630 = vsyncpa %s629, 1

</llo_original>
